<compile_context>
chip_gen: v7x
topology: tpu7x:2x2x1
jax: 0.10.0
libtpu: 0.0.40
codegen_flags: <defaults>
</compile_context>

<pallas_src>
import jax
import jax.numpy as jnp
from jax.experimental import pallas as pl
from jax.experimental.pallas import tpu as pltpu

_LANES = 128
_SUBLANES = 8
_CHUNK = _LANES * _SUBLANES  # 1024


def _make_rmse_partial_kernel(tile_rows: int, valid_rows: int, need_mask: bool):
    """Kernel computing per-tile (8,128) partial sums of squared differences.

    All closed-over values are Python ints/bools, so they lower to literals
    (no captured jnp constants).
    """

    def kernel(yhat_ref, y_ref, out_ref):
        d = yhat_ref[...].astype(jnp.float32) - y_ref[...].astype(jnp.float32)
        sq = d * d
        if need_mask:
            # Ragged last tile: rows >= valid_rows are out-of-bounds garbage.
            base = pl.program_id(0) * tile_rows
            row_ids = base + jax.lax.broadcasted_iota(
                jnp.int32, (tile_rows, _LANES), 0
            )
            sq = jnp.where(row_ids < valid_rows, sq, 0.0)
        # Reduce (tile_rows, 128) -> (8, 128): VPU adds across vregs,
        # keeps 1024-way partial sums for accumulation accuracy.
        partial = sq.reshape(tile_rows // _SUBLANES, _SUBLANES, _LANES).sum(axis=0)
        out_ref[...] = partial.reshape(1, _SUBLANES, _LANES)

    return kernel


def rmse_loss(y_hat, y, *, eps=1e-6, reduction="sum", max_tile_rows=4096):
    """RMSELoss.forward: sqrt(MSE(y_hat, y, reduction) + eps)."""
    assert y_hat.shape == y.shape, "y_hat and y must have identical shapes"
    assert max_tile_rows % _SUBLANES == 0, "max_tile_rows must be a multiple of 8"
    n = int(y_hat.size)

    if reduction == "sum":
        scale = 1.0
    elif reduction == "mean":
        scale = 1.0 / float(n)
    else:
        raise ValueError(f"unsupported reduction: {reduction!r}")

    yh = jnp.ravel(y_hat)
    yy = jnp.ravel(y)
    if yh.dtype != yy.dtype:
        ct = jnp.promote_types(yh.dtype, yy.dtype)
        yh = yh.astype(ct)
        yy = yy.astype(ct)

    # Only pad when the flattened size is not a multiple of 1024 (zero padding
    # contributes 0 to the sum of squared differences).  Typical NN tensors hit
    # the no-copy path.
    pad = (-n) % _CHUNK
    if pad:
        yh = jnp.pad(yh, (0, pad))
        yy = jnp.pad(yy, (0, pad))
    n_padded = n + pad
    rows = n_padded // _LANES  # always a multiple of 8
    yh2 = yh.reshape(rows, _LANES)
    yy2 = yy.reshape(rows, _LANES)

    tile_rows = min(max_tile_rows, rows)          # multiple of 8 in both cases
    num_tiles = pl.cdiv(rows, tile_rows)
    need_mask = (rows % tile_rows) != 0           # ragged last tile -> mask in-kernel

    kernel = _make_rmse_partial_kernel(tile_rows, rows, need_mask)
    itemsize = jnp.dtype(yh2.dtype).itemsize

    partials = pl.pallas_call(
        kernel,
        out_shape=jax.ShapeDtypeStruct((num_tiles, _SUBLANES, _LANES), jnp.float32),
        grid_spec=pltpu.PrefetchScalarGridSpec(
            num_scalar_prefetch=0,
            grid=(num_tiles,),
            in_specs=[
                pl.BlockSpec((tile_rows, _LANES), lambda i: (i, 0)),
                pl.BlockSpec((tile_rows, _LANES), lambda i: (i, 0)),
            ],
            out_specs=pl.BlockSpec((1, _SUBLANES, _LANES), lambda i: (i, 0, 0)),
        ),
        compiler_params=pltpu.CompilerParams(
            # Independent per-tile partials -> parallel axis (dual-TC on v7x).
            dimension_semantics=("parallel",),
        ),
        cost_estimate=pl.CostEstimate(
            flops=3 * n_padded,
            transcendentals=0,
            bytes_accessed=2 * n_padded * itemsize + num_tiles * _CHUNK * 4,
        ),
    )(yh2, yy2)

    # Trivial finalize (nt * 1024 f32 values): sum partials, scale, +eps, sqrt.
    total = jnp.sum(partials, dtype=jnp.float32)
    return jnp.sqrt(total * scale + eps)


def reference_rmse(y_hat, y, eps=1e-6, reduction="sum"):
    se = (y_hat.astype(jnp.float32) - y.astype(jnp.float32)) ** 2
    mse = jnp.sum(se) if reduction == "sum" else jnp.mean(se)
    return jnp.sqrt(mse + eps)


if __name__ == "__main__":
    eps = 1e-6
    key = jax.random.PRNGKey(0)
    k1, k2, k3, k4, k5, k6 = jax.random.split(key, 6)

    # Primary example: image-like autoencoder output, default reduction='sum'.
    y_hat = jax.random.normal(k1, (2, 4, 16, 16), jnp.float32)
    y = jax.random.normal(k2, (2, 4, 16, 16), jnp.float32)
    loss = rmse_loss(y_hat, y, eps=eps, reduction="sum")
    jax.block_until_ready(loss)
    ref = reference_rmse(y_hat, y, eps=eps, reduction="sum")
    assert jnp.allclose(loss, ref, rtol=1e-5, atol=1e-5), (loss, ref)

    # Ragged total size (exercises the zero-pad path) + mean reduction.
    a = jax.random.normal(k3, (3, 5, 7), jnp.float32)
    b = jax.random.normal(k4, (3, 5, 7), jnp.float32)
    loss_m = rmse_loss(a, b, eps=eps, reduction="mean")
    ref_m = reference_rmse(a, b, eps=eps, reduction="mean")
    assert jnp.allclose(loss_m, ref_m, rtol=1e-5, atol=1e-5), (loss_m, ref_m)

    # Multi-tile grid with a ragged (masked) last tile, f32.
    c = jax.random.normal(k5, (48, 128), jnp.float32)
    d = jax.random.normal(k6, (48, 128), jnp.float32)
    loss_t = rmse_loss(c, d, eps=eps, reduction="sum", max_tile_rows=32)
    ref_t = reference_rmse(c, d, eps=eps, reduction="sum")
    assert jnp.allclose(loss_t, ref_t, rtol=1e-5, atol=1e-5), (loss_t, ref_t)

    # Native bf16 streaming (no wrapper upcast), multi-tile with mask.
    cb = c.astype(jnp.bfloat16)
    db = d.astype(jnp.bfloat16)
    loss_b = rmse_loss(cb, db, eps=eps, reduction="sum", max_tile_rows=32)
    ref_b = reference_rmse(cb, db, eps=eps, reduction="sum")
    assert jnp.allclose(loss_b, ref_b, rtol=1e-5, atol=1e-5), (loss_b, ref_b)

    print("KERNEL_OK")
</pallas_src>

<mosaic_0001>
module attributes {stable_mosaic.version = 11 : i64} {
  func.func @kernel(%arg0: i32, %arg1: memref<16x128xf32, #tpu.memory_space<vmem>>, %arg2: memref<16x128xf32, #tpu.memory_space<vmem>>, %arg3: memref<1x8x128xf32, #tpu.memory_space<vmem>>) attributes {dimension_semantics = [#tpu.dimension_semantics<parallel>], iteration_bounds = array<i64: 1>, scalar_prefetch = 0 : i64, scratch_operands = 0 : i64, tpu.core_type = #tpu.core_type<tc>, window_params = [{transform_indices = @transform_0, window_bounds = array<i64: 16, 128>}, {transform_indices = @transform_1, window_bounds = array<i64: 16, 128>}, {transform_indices = @transform_2, window_bounds = array<i64: 1, 8, 128>}]} {
    %c0 = arith.constant 0 : index
    %c0_0 = arith.constant 0 : index
    %0 = vector.load %arg1[%c0, %c0_0] : memref<16x128xf32, #tpu.memory_space<vmem>>, vector<16x128xf32>
    %c0_1 = arith.constant 0 : index
    %c0_2 = arith.constant 0 : index
    %1 = vector.load %arg2[%c0_1, %c0_2] : memref<16x128xf32, #tpu.memory_space<vmem>>, vector<16x128xf32>
    %2 = arith.subf %0, %1 : vector<16x128xf32>
    %3 = arith.mulf %2, %2 : vector<16x128xf32>
    %4 = vector.shape_cast %3 : vector<16x128xf32> to vector<2x8x128xf32>
    %cst = arith.constant dense<0.000000e+00> : vector<8x128xf32>
    %5 = vector.multi_reduction <add>, %4, %cst [0] : vector<2x8x128xf32> to vector<8x128xf32>
    %6 = vector.shape_cast %5 : vector<8x128xf32> to vector<1x8x128xf32>
    %c0_3 = arith.constant 0 : index
    %c0_4 = arith.constant 0 : index
    %c0_5 = arith.constant 0 : index
    %7 = vector.load %arg3[%c0_3, %c0_4, %c0_5] : memref<1x8x128xf32, #tpu.memory_space<vmem>>, vector<1x8x128xf32>
    tpu.vector_store %arg3[%c0_3, %c0_4, %c0_5], %6 {strides = array<i32>} : memref<1x8x128xf32, #tpu.memory_space<vmem>>, vector<1x8x128xf32>,
    return
  }
  func.func @transform_0(%arg0: i32) -> (i32, i32) {
    %c0_i32 = arith.constant 0 : i32
    %c0_i32_0 = arith.constant 0 : i32
    return %arg0, %c0_i32 : i32, i32
  }
  func.func @transform_1(%arg0: i32) -> (i32, i32) {
    %c0_i32 = arith.constant 0 : i32
    %c0_i32_0 = arith.constant 0 : i32
    return %arg0, %c0_i32 : i32, i32
  }
  func.func @transform_2(%arg0: i32) -> (i32, i32, i32) {
    %c0_i32 = arith.constant 0 : i32
    %c0_i32_0 = arith.constant 0 : i32
    %c0_i32_1 = arith.constant 0 : i32
    return %arg0, %c0_i32, %c0_i32_0 : i32, i32, i32
  }
}

</mosaic_0001>

<llo_original>
// kernel: tpu_custom_call.1
$region0: #{tpu_custom_call.1}
  #allocation0 [shape = 'u32[]', space=smem, size = 0x4, offset = 0x4, fixed_abs, tag = 'smem constant byte address 0x4 - core index']
  #allocation1 [shape = 'u32[144,128]{1,0:T(1,128)}', space=vmem, size = 0x12000, scoped, tag = 'internal scratch']
  %s0 = inlined_call_operand.hbm [shape: f32[16,128], index: 0, kind: input, shape index: {}]
  %s1 = inlined_call_operand.hbm [shape: f32[16,128], index: 1, kind: input, shape index: {}]
  %s2 = inlined_call_operand.hbm [shape: f32[1,8,128], index: 2, kind: output, shape index: {}]
  %s3 = sld [smem:[#allocation0]]
  $region26: #{tpu_custom_call.1} parent=0
    _
  %s5 = ssub.s32 1, %s3
  %s6 = scalar_select 0, %s5, %s3
  $region1: #{tpu_custom_call.1} parent=0
    #allocation2 [shape = 'u8[8192]{0}', space=vmem, size = 0x2000, scoped, tag = 'input window, operand 0, single buffered']
    #allocation3 [shape = 's32[1]{0}', space=sflag, size = 0x4, scoped, tag = 'scoped memory for tpu_custom_call.1']
    #allocation4 [shape = 's32[1]{0}', space=sflag, size = 0x4, scoped, tag = 'scoped memory for tpu_custom_call.1']
    #allocation5 [shape = 'u8[8192]{0}', space=vmem, size = 0x2000, scoped, tag = 'input window, operand 1, single buffered']
    #allocation6 [shape = 's32[1]{0}', space=sflag, size = 0x4, scoped, tag = 'scoped memory for tpu_custom_call.1']
    #allocation7 [shape = 'u8[4096]{0}', space=vmem, size = 0x1000, scoped, tag = 'output window, operand 0, single buffered']
    %7 = vsyncpa [#allocation3], 0
    %8 = vsyncpa [#allocation6], 0
    %9 = vsyncpa [#allocation4], 0
    // Predicated region
    $region2: #{tpu_custom_call.1} parent=1 // pred_check
      _
    $region3: #{tpu_custom_call.1} parent=1 // pred_check_branch
      %11 = sbr.rel (0) target = $region5
    $region4: #{tpu_custom_call.1} parent=1 // pred_region
      %s13 = ssub.s32 256, 256
      %14 = vsyncadd [#allocation3], %s13
      %s15 = sshll.u32 [#allocation2], 4
      %s16 = int_to_ptr.vmem [resolvable:$true] %s15
      %21 = dma.hbm_to_vmem [thread:$0]  %s0, 256, %s16, [#allocation3], 128, 128, 8
    $region5: #{tpu_custom_call.1} parent=1 // pred_fallthru
      _
    // Predicated region
    $region6: #{tpu_custom_call.1} parent=1 // pred_check
      _
    $region7: #{tpu_custom_call.1} parent=1 // pred_check_branch
      %23 = sbr.rel (0) target = $region9
    $region8: #{tpu_custom_call.1} parent=1 // pred_region
      %s25 = ssub.s32 256, 256
      %26 = vsyncadd [#allocation6], %s25
      %s27 = sshll.u32 [#allocation5], 4
      %s28 = int_to_ptr.vmem [resolvable:$true] %s27
      %33 = dma.hbm_to_vmem [thread:$0]  %s1, 256, %s28, [#allocation6], 128, 128, 8
    $region9: #{tpu_custom_call.1} parent=1 // pred_fallthru
      _
    // Predicated region
    $region10: #{tpu_custom_call.1} parent=1 // pred_check
      _
    $region11: #{tpu_custom_call.1} parent=1 // pred_check_branch
      %35 = sbr.rel (0) target = $region13
    $region12: #{tpu_custom_call.1} parent=1 // pred_region
      %36 = dma.done [#allocation3], 256
    $region13: #{tpu_custom_call.1} parent=1 // pred_fallthru
      _
    // Predicated region
    $region14: #{tpu_custom_call.1} parent=1 // pred_check
      _
    $region15: #{tpu_custom_call.1} parent=1 // pred_check_branch
      %38 = sbr.rel (0) target = $region17
    $region16: #{tpu_custom_call.1} parent=1 // pred_region
      %39 = dma.done [#allocation6], 256
    $region17: #{tpu_custom_call.1} parent=1 // pred_fallthru
      _
    %v40 = vld [vmem:[#allocation2] sm:$0xff]
    %v41 = vld [vmem:[#allocation2 + $0x8] sm:$0xff]
    %v42 = vld [vmem:[#allocation5] sm:$0xff]
    %v43 = vld [vmem:[#allocation5 + $0x8] sm:$0xff]
    %v44 = vsub.f32 %v40, %v42
    %v45 = vsub.f32 %v41, %v43
    %v46 = vmul.f32 %v44, %v44
    %v47 = vmul.f32 %v45, %v45
    %v48 = vadd.f32 %v46, %v47
    %49 = vst [vmem:[#allocation7] sm:$0xff] %v48
    // Predicated region
    $region18: #{tpu_custom_call.1} parent=1 // pred_check
      _
    $region19: #{tpu_custom_call.1} parent=1 // pred_check_branch
      %51 = sbr.rel (0) target = $region21
    $region20: #{tpu_custom_call.1} parent=1 // pred_region
      %s53 = ssub.s32 128, 128
      %54 = vsyncadd [#allocation4], %s53
      %s56 = sshll.u32 [#allocation7], 4
      %s57 = int_to_ptr.vmem [resolvable:$true] %s56
      %59 = dma.vmem_to_hbm [thread:$0]  %s57, 128, %s2, [#allocation4]
    $region21: #{tpu_custom_call.1} parent=1 // pred_fallthru
      _
    // Predicated region
    $region22: #{tpu_custom_call.1} parent=1 // pred_check
      _
    $region23: #{tpu_custom_call.1} parent=1 // pred_check_branch
      %61 = sbr.rel (0) target = $region25
    $region24: #{tpu_custom_call.1} parent=1 // pred_region
      %62 = dma.done [#allocation4], 128
    $region25: #{tpu_custom_call.1} parent=1 // pred_fallthru
      _
    %63 = vsyncpa [#allocation3], 1
    %64 = vsyncpa [#allocation6], 1
    %65 = vsyncpa [#allocation4], 1

</llo_original>
